<compile_context>
chip_gen: v7x
topology: tpu7x:2x2x1
jax: 0.10.0
libtpu: 0.0.40
codegen_flags: <defaults>
</compile_context>

<pallas_src>
import functools

import jax
import jax.numpy as jnp
from jax.experimental import pallas as pl
from jax.experimental.pallas import tpu as pltpu


def _inv1x1_kernel(w_ref, z_ref, o_ref):
    # w_ref: (B*C, B*C) block-diagonal weight ; z_ref / o_ref: (B*C, Tt)
    o_ref[...] = jnp.dot(
        w_ref[...], z_ref[...], preferred_element_type=jnp.float32
    ).astype(o_ref.dtype)


def _vmem_capacity_bytes():
    """Physical VMEM per core (generation-aware); conservative fallback."""
    try:
        info = pltpu.get_tpu_info()
        cap = getattr(info, "vmem_capacity_bytes", None)
        if cap:
            return int(cap)
    except Exception:
        pass
    return 64 << 20  # v7x-sized fallback: safe on every generation


def _choose_time_tile(row_bytes, T, block_budget_bytes, time_tile=None):
    """Pick a lane-aligned time tile (in elements) and the grid size."""
    L = pl.cdiv(T, 128)  # time length in 128-lane chunks (last may be partial)
    if time_tile is not None:
        tt_lanes = max(1, int(time_tile) // 128)
    else:
        tt_lanes = max(1, block_budget_bytes // max(1, row_bytes * 128))
    tt_lanes = min(tt_lanes, L)

    # Keep at least 2 grid steps whenever T allows: v7x has 2 TensorCores and
    # a 1-step "parallel" grid would serialize all work onto one of them.
    if L >= 2 and pl.cdiv(L, tt_lanes) < 2:
        tt_lanes = pl.cdiv(L, 2)

    grid_t = pl.cdiv(L, tt_lanes)
    # Prefer an EVEN step count (v7x megacore sharding): shrink the tile a
    # little if that makes the grid even.  No effect on v5e/v6e (1 TC).
    if grid_t > 1 and grid_t % 2 == 1:
        for g in range(grid_t + 1, grid_t + 9):
            cand = pl.cdiv(L, g)
            if cand >= 1 and pl.cdiv(L, cand) % 2 == 0:
                tt_lanes = cand
                grid_t = pl.cdiv(L, cand)
                break

    return tt_lanes * 128, grid_t


@functools.partial(
    jax.jit, static_argnames=("reverse", "time_tile", "block_budget_bytes")
)
def invertible_1x1_conv(z, W, reverse=False, *, time_tile=None,
                        block_budget_bytes=None):
    """Forward pass of Invertible1x1Conv.

    z : (B, C, T) array (NCT Conv1d layout)
    W : (C, C) weight matrix (orthogonal at init)
    reverse=False -> returns (W @ z, log_det_W)
    reverse=True  -> returns W^{-1} @ z
    """
    B, C, T = z.shape
    assert W.shape == (C, C)
    BC = B * C
    itemsize = jnp.dtype(z.dtype).itemsize

    if reverse:
        # TODO(synk): PyTorch caches self.W_inverse across calls; stateless
        # JAX glue recomputes the small CxC inverse per call (fused in-jit).
        W_used = jnp.linalg.inv(W.astype(jnp.float32)).astype(z.dtype)
    else:
        W_used = W.astype(z.dtype)

    # Block-diagonal weight: one (B*C, B*C) @ (B*C, Tt) MXU dot per block.
    W_bd = jnp.kron(jnp.eye(B, dtype=z.dtype), W_used)

    # Free reshape: (B, C, T) -> (B*C, T), leading dims are contiguous.
    z2 = z.reshape(BC, T)

    # Generation-aware block budget: 2 in-bufs + 2 out-bufs <= ~48 MiB.
    vmem_cap = _vmem_capacity_bytes()
    if block_budget_bytes is None:
        pipelined_budget = min(48 << 20, (vmem_cap * 3) // 4)
        block_budget_bytes = max(1 << 20, pipelined_budget // 4)

    Tt, grid_t = _choose_time_tile(BC * itemsize, T, block_budget_bytes,
                                   time_tile)

    block_bytes = BC * Tt * itemsize
    w_bytes = BC * BC * itemsize
    needed = 4 * block_bytes + 2 * w_bytes
    vmem_limit = int(min(vmem_cap, max(needed + (4 << 20), 32 << 20)))

    out2 = pl.pallas_call(
        _inv1x1_kernel,
        out_shape=jax.ShapeDtypeStruct((BC, T), z.dtype),
        grid_spec=pltpu.PrefetchScalarGridSpec(
            num_scalar_prefetch=0,
            grid=(grid_t,),
            in_specs=[
                pl.BlockSpec((BC, BC), lambda t: (0, 0)),
                pl.BlockSpec((BC, Tt), lambda t: (0, t)),
            ],
            out_specs=pl.BlockSpec((BC, Tt), lambda t: (0, t)),
        ),
        compiler_params=pltpu.CompilerParams(
            dimension_semantics=("parallel",),
            vmem_limit_bytes=vmem_limit,
        ),
        cost_estimate=pl.CostEstimate(
            flops=2 * B * C * C * T,
            bytes_accessed=2 * BC * T * itemsize + BC * BC * itemsize,
            transcendentals=0,
        ),
    )(W_bd, z2)

    out = out2.reshape(B, C, T)

    if reverse:
        return out

    # Scalar logdet of the small CxC weight: plain-JAX glue, fused in-jit.
    # torch.logdet returns log(det W) (NaN if det <= 0); logabsdet +
    # log(sign) reproduces that exactly.
    sign, logabsdet = jnp.linalg.slogdet(W.astype(jnp.float32))
    log_det_W = (B * T) * (logabsdet + jnp.log(sign))
    return out, log_det_W


def make_weight(c, key):
    """Deterministic init mirroring the PyTorch __init__: QR of a normal
    matrix, with the first column flipped if det < 0 (so det(W) = +1)."""
    A = jax.random.normal(key, (c, c), dtype=jnp.float32)
    Q, _ = jnp.linalg.qr(A)
    det = jnp.linalg.det(Q)
    Q = Q.at[:, 0].set(jnp.where(det < 0, -Q[:, 0], Q[:, 0]))
    return Q


if __name__ == "__main__":
    key = jax.random.PRNGKey(0)
    k_w, k_z = jax.random.split(key)

    # batch, channels (n_group), n_of_groups (time). T deliberately not a
    # multiple of 128 to exercise the masked partial-last-block path.
    B, C, T = 2, 8, 500
    W = make_weight(C, k_w)
    z = jax.random.normal(k_z, (B, C, T), dtype=jnp.float32)

    out, log_det_W = invertible_1x1_conv(z, W, reverse=False)
    out = jax.block_until_ready(out)
    log_det_W = jax.block_until_ready(log_det_W)

    # Reference check against plain-JAX 1x1 conv semantics.
    ref = jnp.einsum("ij,bjt->bit", W, z)
    sign, logabs = jnp.linalg.slogdet(W)
    ref_logdet = B * T * (logabs + jnp.log(sign))

    assert out.shape == (B, C, T)
    assert jnp.allclose(out, ref, atol=1e-4, rtol=1e-4)
    assert jnp.allclose(log_det_W, ref_logdet, atol=1e-4, rtol=1e-4)

    # Also exercise the reverse path: W^{-1} (W z) == z.
    z_rec = jax.block_until_ready(invertible_1x1_conv(out, W, reverse=True))
    assert jnp.allclose(z_rec, z, atol=1e-3, rtol=1e-3)

    print("KERNEL_OK")
</pallas_src>

<mosaic_0001>
module attributes {stable_mosaic.version = 11 : i64} {
  func.func @_inv1x1_kernel(%arg0: i32, %arg1: memref<16x16xf32, #tpu.memory_space<vmem>>, %arg2: memref<16x256xf32, #tpu.memory_space<vmem>>, %arg3: memref<16x256xf32, #tpu.memory_space<vmem>>) attributes {dimension_semantics = [#tpu.dimension_semantics<parallel>], iteration_bounds = array<i64: 2>, scalar_prefetch = 0 : i64, scratch_operands = 0 : i64, tpu.core_type = #tpu.core_type<tc>, window_params = [{pipeline_mode = #tpu.pipeline_mode<synchronous>, transform_indices = @transform_0, window_bounds = array<i64: 16, 16>}, {transform_indices = @transform_1, window_bounds = array<i64: 16, 256>}, {transform_indices = @transform_2, window_bounds = array<i64: 16, 256>}]} {
    %c0 = arith.constant 0 : index
    %c0_0 = arith.constant 0 : index
    %0 = vector.load %arg1[%c0, %c0_0] : memref<16x16xf32, #tpu.memory_space<vmem>>, vector<16x16xf32>
    %c0_1 = arith.constant 0 : index
    %c0_2 = arith.constant 0 : index
    %1 = vector.load %arg2[%c0_1, %c0_2] : memref<16x256xf32, #tpu.memory_space<vmem>>, vector<16x256xf32>
    %cst = arith.constant dense<0.000000e+00> : vector<16x256xf32>
    %2 = tpu.matmul %0, %1, %cst {dimension_numbers = #tpu.dot_dimension_numbers<[1], [0], [0], [1], [0, 0, 1, 1], [], []>} : vector<16x16xf32>, vector<16x256xf32>, vector<16x256xf32> -> vector<16x256xf32>
    %c0_3 = arith.constant 0 : index
    %c0_4 = arith.constant 0 : index
    %3 = vector.load %arg3[%c0_3, %c0_4] : memref<16x256xf32, #tpu.memory_space<vmem>>, vector<16x256xf32>
    tpu.vector_store %arg3[%c0_3, %c0_4], %2 {strides = array<i32>} : memref<16x256xf32, #tpu.memory_space<vmem>>, vector<16x256xf32>,
    return
  }
  func.func @transform_0(%arg0: i32) -> (i32, i32) {
    %c0_i32 = arith.constant 0 : i32
    %c0_i32_0 = arith.constant 0 : i32
    %c0_i32_1 = arith.constant 0 : i32
    return %c0_i32, %c0_i32_0 : i32, i32
  }
  func.func @transform_1(%arg0: i32) -> (i32, i32) {
    %c0_i32 = arith.constant 0 : i32
    %c0_i32_0 = arith.constant 0 : i32
    return %c0_i32, %arg0 : i32, i32
  }
  func.func @transform_2(%arg0: i32) -> (i32, i32) {
    %c0_i32 = arith.constant 0 : i32
    %c0_i32_0 = arith.constant 0 : i32
    return %c0_i32, %arg0 : i32, i32
  }
}

</mosaic_0001>

<llo_original>
// kernel: custom-call.2
$region0: #{custom-call.2}
  %s0 = inlined_call_operand.hbm [shape: f32[8,8], index: 0, kind: input, shape index: {}]
  %s1 = inlined_call_operand.vmem [shape: f32[8,8], index: 1, kind: output, shape index: {0}]
  %s2 = inlined_call_operand.vmem [shape: s32[8], index: 2, kind: output, shape index: {1}]
  %s3 = inlined_call_operand.hbm [shape: s32[8], index: 3, kind: output, shape index: {2}]
  %4 = xla_tuple %s1, %s2, %s3
  $region1: #{custom-call.2} parent=0
    #allocation0 [shape = 'u8[4096]{0}', space=vmem, size = 0x1000, scoped, tag = 'operand span for operand 0']
    #allocation1 [shape = 's32[1]{0}', space=sflag, size = 0x4, scoped, tag = 'scoped memory for custom-call.2']
    #allocation2 [shape = 's32[1]{0}', space=sflag, size = 0x4, scoped, tag = 'scoped memory for custom-call.2']
    #allocation3 [shape = 'u8[4096]{0}', space=vmem, size = 0x1000, scoped, tag = 'operand span for operand 1']
    #allocation4 [shape = 'u8[4096]{0}', space=vmem, size = 0x1000, scoped, tag = 'operand span for operand 2']
    #allocation5 [shape = 'u8[512]{0}', space=vmem, size = 0x400, scoped, tag = 'packed  for operand 2']
    #allocation6 [shape = 'u8[4096]{0}', space=vmem, size = 0x1000, scoped, tag = 'operand span for operand 3']
    #allocation7 [shape = 'u8[512]{0}', space=vmem, size = 0x400, scoped, tag = 'packed  for operand 3']
    #allocation8 [shape = 's32[8,128]{1,0}', space=vmem, size = 0x1000, scoped, tag = 'scratch for permutations']
    %5 = vsyncpa [#allocation1], 0
    %6 = vsyncpa [#allocation2], 0
    %s8 = ssub.s32 128, 128
    %9 = vsyncadd [#allocation1], %s8
    %s10 = sshll.u32 [#allocation0], 4
    %s11 = int_to_ptr.vmem [resolvable:$true] %s10
    %13 = dma.hbm_to_vmem [thread:$0]  %s0, 128, %s11, [#allocation1]
    %14 = dma.done [#allocation1], 128
    %v15 = vld [vmem:[#allocation0] sm:$0xff]
    %16 = vst [vmem:[#allocation3] sm:$0xff] %v15
    %17 = vst [vmem:[#allocation4] sm:$0x1] 0
    %v18 = vlaneseq
    %v19 = vshrl.u32 %v18, 7
    %v20 = vmov %v19
    %22 = vst [vmem:[#allocation8] sm:$0xff] %v20
    loop: start=0, step=1, limit=8
    $region3: #{custom-call.2} parent=1 // loop_pre_header
      _
    $region4: #{custom-call.2} parent=1 // loop_header
      %s24 = sphi 0, %s28
      %p25 = scmp.ge.s32.totalorder %s24, 8
    $region5: #{custom-call.2} parent=1 // loop_header_branch
      %27 = sbr.rel (%p25) target = $region9
    $region6: #{custom-call.2} parent=1 // loop_body
      %v29 = vstv %s24
      %v30 = vlaneseq
      %v31 = vshrl.u32 %v30, 7
      %v32 = vmov %v31
      %v33 = vld [vmem:[#allocation3] sm:$0xff]
      %v34 = vand.u32 2147483647, %v33
      %v36 = vstv %s24
      %vm37 = vcmp.ge.s32.totalorder %v32, %v36
      %vm38 = vcmp.lt.s32.totalorder %v32, 8
      %vm39 = vmand %vm37, %vm38
      %vm40 = vcmp.lt.f32.partialorder -inf, %v34
      %vm41 = vmand %vm39, %vm40
      %v42 = vsel %vm41, %v32, %v29
      %v43 = vsel %vm41, %v34, -inf
      %v44 = vrot.slane %v43, 1
      %v45 = vrot.slane %v42, 1
      %vm46 = vcmp.ge.f32.partialorder %v44, %v43
      %v47 = vsel %vm46, %v44, %v43
      %v48 = vsel %vm46, %v45, %v42
      %v49 = vrot.slane %v44, 1
      %v50 = vrot.slane %v45, 1
      %vm51 = vcmp.ge.f32.partialorder %v49, %v47
      %v52 = vsel %vm51, %v49, %v47
      %v53 = vsel %vm51, %v50, %v48
      %v54 = vrot.slane %v49, 1
      %v55 = vrot.slane %v50, 1
      %vm56 = vcmp.ge.f32.partialorder %v54, %v52
      %v57 = vsel %vm56, %v54, %v52
      %v58 = vsel %vm56, %v55, %v53
      %v59 = vrot.slane %v54, 1
      %v60 = vrot.slane %v55, 1
      %vm61 = vcmp.ge.f32.partialorder %v59, %v57
      %v62 = vsel %vm61, %v59, %v57
      %v63 = vsel %vm61, %v60, %v58
      %v64 = vrot.slane %v59, 1
      %v65 = vrot.slane %v60, 1
      %vm66 = vcmp.ge.f32.partialorder %v64, %v62
      %v67 = vsel %vm66, %v64, %v62
      %v68 = vsel %vm66, %v65, %v63
      %v69 = vrot.slane %v64, 1
      %v70 = vrot.slane %v65, 1
      %vm71 = vcmp.ge.f32.partialorder %v69, %v67
      %v72 = vsel %vm71, %v69, %v67
      %v73 = vsel %vm71, %v70, %v68
      %v74 = vrot.slane %v69, 1
      %v75 = vrot.slane %v70, 1
      %vm76 = vcmp.ge.f32.partialorder %v74, %v72
      %v77 = vsel %vm76, %v74, %v72
      %v78 = vsel %vm76, %v75, %v73
      %s79 = ssub.s32 128, %s24
      %80 = vrot.lane.b32.xlu0 %v78, %s79
      %v81 = vpop.permute.xlu0 %80
      %s82 = vtos %v81
      %v83 = vstv %s24
      %v84 = vlaneseq
      %v85 = vand.u32 %v84, 127
      %vm86 = vcmp.eq.s32.totalorder %v85, %v83
      %v87 = vstv %s82
      %v88 = vld [vmem:[#allocation4] ss:$0 sm:$0xff]
      %v89 = vsel %vm86, %v87, %v88
      %90 = vst [vmem:[#allocation4] sm:$0x1] %v89
      %s91 = scalar_lea.vmem [#allocation3], %s24
      %s92 = scalar_lea.vmem [#allocation3], %s82
      %v93 = vld [vmem:[%s91] ss:$0 sm:$0xff]
      %v94 = vld [vmem:[%s92] ss:$0 sm:$0xff]
      %95 = vst [vmem:[%s92] sm:$0x1] %v93
      %96 = vst [vmem:[%s91] sm:$0x1] %v94
      %s97 = scalar_lea.vmem [#allocation8], %s24
      %s98 = scalar_lea.vmem [#allocation8], %s82
      %v99 = vld [vmem:[%s97] ss:$0 sm:$0xff]
      %v100 = vld [vmem:[%s98] ss:$0 sm:$0xff]
      %101 = vst [vmem:[%s98] sm:$0x1] %v99
      %102 = vst [vmem:[%s97] sm:$0x1] %v100
      %vm103 = vcmp.ne.f32.partialorder %v94, 0.0
      %vm104 = vmand %vm86, %vm103
      %v105 = vsel %vm104, %v94, 1.0
      %v106 = vlaneseq
      %v107 = vand.u32 %v106, 127
      %v108 = vstv %s24
      %vm109 = vcmp.gt.s32.totalorder %v107, %v108
      %v110 = vsel %vm109, %v94, 0.0
      %v111 = vlaneseq
      %v112 = vshrl.u32 %v111, 7
      %v113 = vmov %v112
      %v114 = vld [vmem:[#allocation3] sm:$0xff]
      %v116 = vstv %s24
      %vm117 = vcmp.gt.s32.totalorder %v113, %v116
      %v118 = vsel %vm117, %v105, 1.0
      %v119 = vrcp.pop %v118
      %v120 = vmul.f32 %v114, %v119
      %vm121 = vmand %vm117, %vm86
      %v122 = vsel %vm121, %v120, 0.0
      %123 = vadd.xlane.f32.xlu0 %v122
      %v124 = vpop.xlane.xlu0 %123
      %v125 = vmul.f32 %v124, %v110
      %v126 = vsub.f32 %v120, %v125
      %127 = vst [vmem:[#allocation3] sm:$0xff] %v126
    $region7: #{custom-call.2} parent=1 // loop_footer
      %s28 = sadd.s32 1, %s24
    $region8: #{custom-call.2} parent=1 // loop_footer_branch
      %23 = sbr.rel target = $region4
    $region9: #{custom-call.2} parent=1 // loop_exit
      _
    %v128 = vld [vmem:[#allocation8] sm:$0xff]
    %s129 = scalar_lea.vmem [#allocation8], 8
    %s130 = scalar_lea.vmem [#allocation8], 16
    %s131 = scalar_lea.vmem [#allocation8], 24
    %s132 = scalar_lea.vmem [#allocation8], 32
    %s133 = scalar_lea.vmem [#allocation8], 40
    %s134 = scalar_lea.vmem [#allocation8], 48
    %s135 = scalar_lea.vmem [#allocation8], 56
    %s136 = scalar_lea.vmem [#allocation8], 64
    %s137 = scalar_lea.vmem [#allocation8], 72
    %s138 = scalar_lea.vmem [#allocation8], 80
    %s139 = scalar_lea.vmem [#allocation8], 88
    %s140 = scalar_lea.vmem [#allocation8], 96
    %s141 = scalar_lea.vmem [#allocation8], 104
    %s142 = scalar_lea.vmem [#allocation8], 112
    %s143 = scalar_lea.vmem [#allocation8], 120
    %144 = vxpose.xlu0.b32.start [1/16] %v128, 128
    %145 = vxpose.xlu0.b32.cont [2/16] 0, 128
    %146 = vxpose.xlu0.b32.cont [3/16] 0, 128
    %147 = vxpose.xlu0.b32.cont [4/16] 0, 128
    %148 = vxpose.xlu0.b32.cont [5/16] 0, 128
    %149 = vxpose.xlu0.b32.cont [6/16] 0, 128
    %150 = vxpose.xlu0.b32.cont [7/16] 0, 128
    %151 = vxpose.xlu0.b32.cont [8/16] 0, 128
    %152 = vxpose.xlu0.b32.cont [9/16] 0, 128
    %153 = vxpose.xlu0.b32.cont [10/16] 0, 128
    %154 = vxpose.xlu0.b32.cont [11/16] 0, 128
    %155 = vxpose.xlu0.b32.cont [12/16] 0, 128
    %156 = vxpose.xlu0.b32.cont [13/16] 0, 128
    %157 = vxpose.xlu0.b32.cont [14/16] 0, 128
    %158 = vxpose.xlu0.b32.cont [15/16] 0, 128
    %159 = vxpose.xlu0.b32.end [16/16] 0, 128
    %v160 = vpop.trf.xlu0
    %v161 = vpop.trf.xlu0
    %v162 = vpop.trf.xlu0
    %v163 = vpop.trf.xlu0
    %v164 = vpop.trf.xlu0
    %v165 = vpop.trf.xlu0
    %v166 = vpop.trf.xlu0
    %v167 = vpop.trf.xlu0
    %v168 = vpop.trf.xlu0
    %v169 = vpop.trf.xlu0
    %v170 = vpop.trf.xlu0
    %v171 = vpop.trf.xlu0
    %v172 = vpop.trf.xlu0
    %v173 = vpop.trf.xlu0
    %v174 = vpop.trf.xlu0
    %v175 = vpop.trf.xlu0
    %176 = vst [vmem:[#allocation6] sm:$0x1] %v160
    %s178 = sshllo.u32 0, 1
    %v180 = vld [vmem:[#allocation4] sm:%s178]
    %s181 = sshllo.u32 0, 1
    %182 = vst [vmem:[#allocation5] sm:%s181] %v180
    %s184 = sshllo.u32 0, 1
    %v186 = vld [vmem:[#allocation6] sm:%s184]
    %s187 = sshllo.u32 0, 1
    %188 = vst [vmem:[#allocation7] sm:%s187] %v186
    %p190 = scmp.gt.s32.totalorder 8, 0
    // Predicated region
    $region10: #{custom-call.2} parent=1 // pred_check
      %p191 = pneg %p190
    $region11: #{custom-call.2} parent=1 // pred_check_branch
      %193 = sbr.rel (%p191) target = $region13
    $region12: #{custom-call.2} parent=1 // pred_region
      %s194 = sshra.s32 8, 3
      %p195 = scmp.gt.s32.totalorder %s194, 0
      // Predicated region
      $region14: #{custom-call.2} parent=12 // pred_check
        %p196 = pneg %p195
      $region15: #{custom-call.2} parent=12 // pred_check_branch
        %198 = sbr.rel (%p196) target = $region17
      $region16: #{custom-call.2} parent=12 // pred_region
        %s199 = ssub.s32 %s194, 1
        %s200 = smul.u32 %s199, 128
        %s201 = sshra.s32 %s200, 4
        %s202 = scalar_lea.vmem [#allocation3], %s201
        %v203 = vld [vmem:[#allocation3] sm:$0xff]
        // While loop
        $region18: #{custom-call.2} parent=16 // loop_pre_header
          _
        $region19: #{custom-call.2} parent=16 // loop_header
          %s204 = sphi [#allocation3], %s226
          %s205 = sphi %s1, %s227
          %v206 = vphi %v203, %v228
          %s207 = ssub.s32 %s202, 64
          %p208 = scmp.gt.s32.totalorder %s204, %s207
        $region20: #{custom-call.2} parent=16 // loop_header_branch
          %210 = sbr.rel (%p208) target = $region24
        $region21: #{custom-call.2} parent=16 // loop_body
          %211 = vst [vmem:[%s205] sm:$0xff] %v206
          %v212 = vld [vmem:[%s204 + $0x8] sm:$0xff]
          %213 = vst [vmem:[%s205 + $0x8] sm:$0xff] %v212
          %v214 = vld [vmem:[%s204 + $0x10] sm:$0xff]
          %215 = vst [vmem:[%s205 + $0x10] sm:$0xff] %v214
          %v216 = vld [vmem:[%s204 + $0x18] sm:$0xff]
          %217 = vst [vmem:[%s205 + $0x18] sm:$0xff] %v216
          %v218 = vld [vmem:[%s204 + $0x20] sm:$0xff]
          %219 = vst [vmem:[%s205 + $0x20] sm:$0xff] %v218
          %v220 = vld [vmem:[%s204 + $0x28] sm:$0xff]
          %221 = vst [vmem:[%s205 + $0x28] sm:$0xff] %v220
          %v222 = vld [vmem:[%s204 + $0x30] sm:$0xff]
          %223 = vst [vmem:[%s205 + $0x30] sm:$0xff] %v222
          %v224 = vld [vmem:[%s204 + $0x38] sm:$0xff]
          %225 = vst [vmem:[%s205 + $0x38] sm:$0xff] %v224
        $region22: #{custom-call.2} parent=16 // loop_footer
          %s226 = scalar_lea.vmem %s204, 64
          %s227 = scalar_lea.vmem %s205, 64
          %v228 = vld [vmem:[%s204 + $0x40] sm:$0xff]
        $region23: #{custom-call.2} parent=16 // loop_footer_branch
          %229 = sbr.rel target = $region19
        $region24: #{custom-call.2} parent=16 // loop_exit
          _
        // While loop
        $region25: #{custom-call.2} parent=16 // loop_pre_header
          _
        $region26: #{custom-call.2} parent=16 // loop_header
          %s230 = sphi %s204, %s238
          %s231 = sphi %s205, %s239
          %v232 = vphi %v206, %v232
          %p233 = scmp.gt.s32.totalorder %s230, %s202
        $region27: #{custom-call.2} parent=16 // loop_header_branch
          %235 = sbr.rel (%p233) target = $region31
        $region28: #{custom-call.2} parent=16 // loop_body
          %v236 = vld [vmem:[%s230] sm:$0xff]
          %237 = vst [vmem:[%s231] sm:$0xff] %v236
        $region29: #{custom-call.2} parent=16 // loop_footer
          %s238 = scalar_lea.vmem %s230, 8
          %s239 = scalar_lea.vmem %s231, 8
        $region30: #{custom-call.2} parent=16 // loop_footer_branch
          %240 = sbr.rel target = $region26
        $region31: #{custom-call.2} parent=16 // loop_exit
          _
      $region17: #{custom-call.2} parent=12 // pred_fallthru
        _
      %s241 = sand.u32 8, 7
      %s242 = sshllo.u32 0, %s241
      %s243 = smul.u32 %s194, 128
      %s244 = sshra.s32 %s243, 4
      %s245 = scalar_lea.vmem %s1, %s244
      %s246 = smul.u32 %s194, 128
      %s247 = sshra.s32 %s246, 4
      %s248 = scalar_lea.vmem [#allocation3], %s247
      %v249 = vld [vmem:[%s248] sm:%s242]
      %250 = vst [vmem:[%s245] sm:%s242] %v249
    $region13: #{custom-call.2} parent=1 // pred_fallthru
      _
    // Predicated region
    $region32: #{custom-call.2} parent=1 // pred_check
      _
    $region33: #{custom-call.2} parent=1 // pred_check_branch
      %252 = sbr.rel (0) target = $region35
    $region34: #{custom-call.2} parent=1 // pred_region
      %p254 = scmp.gt.s32.totalorder 1, 0
      // Predicated region
      $region36: #{custom-call.2} parent=34 // pred_check
        %p255 = pneg %p254
      $region37: #{custom-call.2} parent=34 // pred_check_branch
        %257 = sbr.rel (%p255) target = $region39
      $region38: #{custom-call.2} parent=34 // pred_region
        %s258 = sshra.s32 1, 3
        %p259 = scmp.gt.s32.totalorder %s258, 0
        // Predicated region
        $region40: #{custom-call.2} parent=38 // pred_check
          %p260 = pneg %p259
        $region41: #{custom-call.2} parent=38 // pred_check_branch
          %262 = sbr.rel (%p260) target = $region43
        $region42: #{custom-call.2} parent=38 // pred_region
          %s263 = ssub.s32 %s258, 1
          %s264 = smul.u32 %s263, 128
          %s265 = sshra.s32 %s264, 4
          %s266 = scalar_lea.vmem [#allocation5], %s265
          %v267 = vld [vmem:[#allocation5] sm:$0xff]
          // While loop
          $region44: #{custom-call.2} parent=42 // loop_pre_header
            _
          $region45: #{custom-call.2} parent=42 // loop_header
            %s268 = sphi [#allocation5], %s290
            %s269 = sphi %s2, %s291
            %v270 = vphi %v267, %v292
            %s271 = ssub.s32 %s266, 64
            %p272 = scmp.gt.s32.totalorder %s268, %s271
          $region46: #{custom-call.2} parent=42 // loop_header_branch
            %274 = sbr.rel (%p272) target = $region50
          $region47: #{custom-call.2} parent=42 // loop_body
            %275 = vst [vmem:[%s269] sm:$0xff] %v270
            %v276 = vld [vmem:[%s268 + $0x8] sm:$0xff]
            %277 = vst [vmem:[%s269 + $0x8] sm:$0xff] %v276
            %v278 = vld [vmem:[%s268 + $0x10] sm:$0xff]
            %279 = vst [vmem:[%s269 + $0x10] sm:$0xff] %v278
            %v280 = vld [vmem:[%s268 + $0x18] sm:$0xff]
            %281 = vst [vmem:[%s269 + $0x18] sm:$0xff] %v280
            %v282 = vld [vmem:[%s268 + $0x20] sm:$0xff]
            %283 = vst [vmem:[%s269 + $0x20] sm:$0xff] %v282
            %v284 = vld [vmem:[%s268 + $0x28] sm:$0xff]
            %285 = vst [vmem:[%s269 + $0x28] sm:$0xff] %v284
            %v286 = vld [vmem:[%s268 + $0x30] sm:$0xff]
            %287 = vst [vmem:[%s269 + $0x30] sm:$0xff] %v286
            %v288 = vld [vmem:[%s268 + $0x38] sm:$0xff]
            %289 = vst [vmem:[%s269 + $0x38] sm:$0xff] %v288
          $region48: #{custom-call.2} parent=42 // loop_footer
            %s290 = scalar_lea.vmem %s268, 64
            %s291 = scalar_lea.vmem %s269, 64
            %v292 = vld [vmem:[%s268 + $0x40] sm:$0xff]
          $region49: #{custom-call.2} parent=42 // loop_footer_branch
            %293 = sbr.rel target = $region45
          $region50: #{custom-call.2} parent=42 // loop_exit
            _
          // While loop
          $region51: #{custom-call.2} parent=42 // loop_pre_header
            _
          $region52: #{custom-call.2} parent=42 // loop_header
            %s294 = sphi %s268, %s302
            %s295 = sphi %s269, %s303
            %v296 = vphi %v270, %v296
            %p297 = scmp.gt.s32.totalorder %s294, %s266
          $region53: #{custom-call.2} parent=42 // loop_header_branch
            %299 = sbr.rel (%p297) target = $region57
          $region54: #{custom-call.2} parent=42 // loop_body
            %v300 = vld [vmem:[%s294] sm:$0xff]
            %301 = vst [vmem:[%s295] sm:$0xff] %v300
          $region55: #{custom-call.2} parent=42 // loop_footer
            %s302 = scalar_lea.vmem %s294, 8
            %s303 = scalar_lea.vmem %s295, 8
          $region56: #{custom-call.2} parent=42 // loop_footer_branch
            %304 = sbr.rel target = $region52
          $region57: #{custom-call.2} parent=42 // loop_exit
            _
        $region43: #{custom-call.2} parent=38 // pred_fallthru
          _
        %s305 = sand.u32 1, 7
        %s306 = sshllo.u32 0, %s305
        %s307 = smul.u32 %s258, 128
        %s308 = sshra.s32 %s307, 4
        %s309 = scalar_lea.vmem %s2, %s308
        %s310 = smul.u32 %s258, 128
        %s311 = sshra.s32 %s310, 4
        %s312 = scalar_lea.vmem [#allocation5], %s311
        %v313 = vld [vmem:[%s312] sm:%s306]
        %314 = vst [vmem:[%s309] sm:%s306] %v313
      $region39: #{custom-call.2} parent=34 // pred_fallthru
        _
    $region35: #{custom-call.2} parent=1 // pred_fallthru
      _
    // Predicated region
    $region58: #{custom-call.2} parent=1 // pred_check
      _
    $region59: #{custom-call.2} parent=1 // pred_check_branch
      %316 = sbr.rel (0) target = $region61
    $region60: #{custom-call.2} parent=1 // pred_region
      %s318 = ssub.s32 16, 16
      %319 = vsyncadd [#allocation2], %s318
      %s320 = sshll.u32 [#allocation7], 4
      %s321 = int_to_ptr.vmem [resolvable:$true] %s320
      %323 = dma.vmem_to_hbm [thread:$0]  %s321, 16, %s3, [#allocation2]
    $region61: #{custom-call.2} parent=1 // pred_fallthru
      _
    // Predicated region
    $region62: #{custom-call.2} parent=1 // pred_check
      _
    $region63: #{custom-call.2} parent=1 // pred_check_branch
      %325 = sbr.rel (0) target = $region65
    $region64: #{custom-call.2} parent=1 // pred_region
      _
    $region65: #{custom-call.2} parent=1 // pred_fallthru
      _
    // Predicated region
    $region66: #{custom-call.2} parent=1 // pred_check
      _
    $region67: #{custom-call.2} parent=1 // pred_check_branch
      %327 = sbr.rel (0) target = $region69
    $region68: #{custom-call.2} parent=1 // pred_region
      %328 = dma.done [#allocation2], 16
    $region69: #{custom-call.2} parent=1 // pred_fallthru
      _
    %329 = vsyncpa [#allocation1], 1
    %330 = vsyncpa [#allocation2], 1

// kernel: invertible_1x1_conv.1
$region0: #{invertible_1x1_conv.1}
  #allocation0 [shape = 'u32[]', space=smem, size = 0x4, offset = 0x4, fixed_abs, tag = 'smem constant byte address 0x4 - core index']
  #allocation1 [shape = 'u32[144,128]{1,0:T(1,128)}', space=vmem, size = 0x12000, scoped, tag = 'internal scratch']
  %s0 = inlined_call_operand.vmem [shape: f32[16,16], index: 0, kind: input, shape index: {}]
  %s1 = inlined_call_operand.vmem [shape: f32[16,500], index: 1, kind: input, shape index: {}]
  %s2 = inlined_call_operand.hbm [shape: f32[16,500], index: 2, kind: output, shape index: {}]
  %s3 = sld [smem:[#allocation0]]
  $region64: #{invertible_1x1_conv.1} parent=0
    _
  %s5 = ssub.s32 1, %s3
  %s6 = scalar_select 0, %s5, %s3
  $region1: #{invertible_1x1_conv.1} parent=0
    #allocation2 [shape = 'u8[32768]{0}', space=vmem, size = 0x8000, scoped, tag = 'input window, operand 1']
    #allocation3 [shape = 'u8[32768]{0}', space=vmem, size = 0x8000, scoped, tag = 'output window, operand 0']
    #allocation4 [shape = 's32[2]{0}', space=sflag, size = 0x8, scoped, tag = 'scoped memory for invertible_1x1_conv.1']
    %7 = vsyncpa [#allocation4], 0
    %s8 = scalar_lea.sflag [#allocation4], 1
    %9 = vsyncpa %s8, 0
    loop: start=0, step=1, limit=4
    $region2: #{invertible_1x1_conv.1} parent=1 // loop_pre_header
      _
    $region3: #{invertible_1x1_conv.1} parent=1 // loop_header
      %s11 = sphi 0, %s15
      %p12 = scmp.ge.s32.totalorder %s11, 4
      %s19 = sphi 0, %s19
      %s21 = sphi 0, %s19
      %s22 = sphi 0, %s21
      %s36 = sphi 0, %s22
      %s42 = sphi 0, %s44
      %s45 = sphi 0, %s42
      %s46 = sphi 0, %s45
      %s62 = sphi 0, %s46
      %s68 = sphi 0, %s70
      %s71 = sphi 0, %s68
      %s72 = sphi 0, %s71
      %s88 = sphi 0, %s72
    $region4: #{invertible_1x1_conv.1} parent=1 // loop_header_branch
      %14 = sbr.rel (%p12) target = $region8
    $region5: #{invertible_1x1_conv.1} parent=1 // loop_body
      %s16 = ssub.s32 %s11, 1
      %s17 = ssub.s32 %s11, 2
      %s18 = sadd.s32 %s11, 1
      %s20 = sadd.s32 %s19, 1
      %p23 = scmp.eq.s32.totalorder %s11, 1
      %p24 = scmp.ne.s32.totalorder %s19, %s21
      %p25 = scmp.eq.s32.totalorder %s11, 0
      %p26 = por %p24, %p25
      %p27 = scmp.ne.s32.totalorder %s19, %s21
      %p28 = scmp.eq.s32.totalorder %s16, 1
      %p29 = por %p27, %p28
      %p30 = scmp.ne.s32.totalorder %s21, %s22
      %p31 = scmp.eq.s32.totalorder %s16, 0
      %p32 = por %p30, %p31
      %p33 = scmp.ne.s32.totalorder %s21, %s22
      %p34 = scmp.eq.s32.totalorder %s17, 1
      %p35 = por %p33, %p34
      %p37 = scmp.ne.s32.totalorder %s22, %s36
      %p38 = scmp.eq.s32.totalorder %s17, 0
      %p39 = por %p37, %p38
      %s40 = ssub.s32 %s11, %s18
      %p41 = scmp.eq.s32.totalorder %s40, 0
      %s43 = sadd.s32 %s42, 1
      %s44 = scalar_select %p41, %s42, %s43
      %p47 = pneg %p41
      %p48 = scmp.eq.s32.totalorder %s11, 1
      %p49 = por %p47, %p48
      %p50 = scmp.ne.s32.totalorder %s42, %s45
      %p51 = scmp.eq.s32.totalorder %s11, 0
      %p52 = por %p50, %p51
      %p53 = scmp.ne.s32.totalorder %s42, %s45
      %p54 = scmp.eq.s32.totalorder %s16, 1
      %p55 = por %p53, %p54
      %p56 = scmp.ne.s32.totalorder %s45, %s46
      %p57 = scmp.eq.s32.totalorder %s16, 0
      %p58 = por %p56, %p57
      %p59 = scmp.ne.s32.totalorder %s45, %s46
      %p60 = scmp.eq.s32.totalorder %s17, 1
      %p61 = por %p59, %p60
      %p63 = scmp.ne.s32.totalorder %s46, %s62
      %p64 = scmp.eq.s32.totalorder %s17, 0
      %p65 = por %p63, %p64
      %s66 = ssub.s32 %s11, %s18
      %p67 = scmp.eq.s32.totalorder %s66, 0
      %s69 = sadd.s32 %s68, 1
      %s70 = scalar_select %p67, %s68, %s69
      %p73 = pneg %p67
      %p74 = scmp.eq.s32.totalorder %s11, 1
      %p75 = por %p73, %p74
      %p76 = scmp.ne.s32.totalorder %s68, %s71
      %p77 = scmp.eq.s32.totalorder %s11, 0
      %p78 = por %p76, %p77
      %p79 = scmp.ne.s32.totalorder %s68, %s71
      %p80 = scmp.eq.s32.totalorder %s16, 1
      %p81 = por %p79, %p80
      %p82 = scmp.ne.s32.totalorder %s71, %s72
      %p83 = scmp.eq.s32.totalorder %s16, 0
      %p84 = por %p82, %p83
      %p85 = scmp.ne.s32.totalorder %s71, %s72
      %p86 = scmp.eq.s32.totalorder %s17, 1
      %p87 = por %p85, %p86
      %p89 = scmp.ne.s32.totalorder %s72, %s88
      %p90 = scmp.eq.s32.totalorder %s17, 0
      %p91 = por %p89, %p90
      %p92 = scmp.le.s32.totalorder 1, %s11
      %p93 = scmp.lt.s32.totalorder %s11, 3
      %p94 = pnand %p92, %p93
      %p95 = pneg %p94
      // Predicated region
      $region9: #{invertible_1x1_conv.1} parent=5 // pred_check
        _
      $region10: #{invertible_1x1_conv.1} parent=5 // pred_check_branch
        %97 = sbr.rel (%p94) target = $region12
      $region11: #{invertible_1x1_conv.1} parent=5 // pred_region
        %s98 = ssub.s32 %s11, 1
        // Predicated region
        $region13: #{invertible_1x1_conv.1} parent=11 // pred_check
          %p99 = pneg %p32
        $region14: #{invertible_1x1_conv.1} parent=11 // pred_check_branch
          %101 = sbr.rel (%p99) target = $region16
        $region15: #{invertible_1x1_conv.1} parent=11 // pred_region
          _
        $region16: #{invertible_1x1_conv.1} parent=11 // pred_fallthru
          _
      $region12: #{invertible_1x1_conv.1} parent=5 // pred_fallthru
        _
      %p102 = scmp.lt.s32.totalorder %s11, 2
      // Predicated region
      $region17: #{invertible_1x1_conv.1} parent=5 // pred_check
        %p103 = pneg %p102
      $region18: #{invertible_1x1_conv.1} parent=5 // pred_check_branch
        %105 = sbr.rel (%p103) target = $region20
      $region19: #{invertible_1x1_conv.1} parent=5 // pred_region
        // Predicated region
        $region21: #{invertible_1x1_conv.1} parent=19 // pred_check
          %p106 = pneg %p52
        $region22: #{invertible_1x1_conv.1} parent=19 // pred_check_branch
          %108 = sbr.rel (%p106) target = $region24
        $region23: #{invertible_1x1_conv.1} parent=19 // pred_region
          %s109 = sand.u32 %s42, 1
          %s110 = sand.u32 %s42, 1
          %s111 = smul.addr %s110, 32
          %s112 = scalar_lea.vmem [#allocation2], %s111
          %s113 = smul.u32 2, %s11
          %s114 = smul.addr %s113, 8
          %s115 = scalar_lea.vmem %s1, %s114
          // Predicated region
          $region25: #{invertible_1x1_conv.1} parent=23 // pred_check
            _
          $region26: #{invertible_1x1_conv.1} parent=23 // pred_check_branch
            %117 = sbr.rel (0) target = $region28
          $region27: #{invertible_1x1_conv.1} parent=23 // pred_region
            // Predicated region
            $region29: #{invertible_1x1_conv.1} parent=27 // pred_check
              _
            $region30: #{invertible_1x1_conv.1} parent=27 // pred_check_branch
              %119 = sbr.rel (0) target = $region32
            $region31: #{invertible_1x1_conv.1} parent=27 // pred_region
              loop: start=0, step=1, limit=1
              $region33: #{invertible_1x1_conv.1} parent=31 // loop_pre_header
                _
              $region34: #{invertible_1x1_conv.1} parent=31 // loop_header
                %s121 = sphi 0, %s125
                %p122 = scmp.ge.s32.totalorder %s121, 1
                %s126 = sphi %s115, %s115
                %s127 = sphi %s112, %s112
              $region35: #{invertible_1x1_conv.1} parent=31 // loop_header_branch
                %124 = sbr.rel (%p122) target = $region39
              $region36: #{invertible_1x1_conv.1} parent=31 // loop_body
                %v128 = vld [vmem:[%s126] sm:$0xff]
                %129 = vst [vmem:[%s127] sm:$0xff] %v128
                %v130 = vld [vmem:[%s126 + $0x8] sm:$0xff]
                %131 = vst [vmem:[%s127 + $0x8] sm:$0xff] %v130
                %v132 = vld [vmem:[%s126 + $0x20] sm:$0xff]
                %133 = vst [vmem:[%s127 + $0x10] sm:$0xff] %v132
                %v134 = vld [vmem:[%s126 + $0x28] sm:$0xff]
                %135 = vst [vmem:[%s127 + $0x18] sm:$0xff] %v134
              $region37: #{invertible_1x1_conv.1} parent=31 // loop_footer
                %s125 = sadd.s32 1, %s121
              $region38: #{invertible_1x1_conv.1} parent=31 // loop_footer_branch
                %120 = sbr.rel target = $region34
              $region39: #{invertible_1x1_conv.1} parent=31 // loop_exit
                _
            $region32: #{invertible_1x1_conv.1} parent=27 // pred_fallthru
              _
            // Predicated region
            $region40: #{invertible_1x1_conv.1} parent=27 // pred_check
              _
            $region41: #{invertible_1x1_conv.1} parent=27 // pred_check_branch
              %137 = sbr.rel target = $region43
            $region42: #{invertible_1x1_conv.1} parent=27 // pred_region
              _
            $region43: #{invertible_1x1_conv.1} parent=27 // pred_fallthru
              _
          $region28: #{invertible_1x1_conv.1} parent=23 // pred_fallthru
            _
          %138 = vnop
        $region24: #{invertible_1x1_conv.1} parent=19 // pred_fallthru
          _
      $region20: #{invertible_1x1_conv.1} parent=5 // pred_fallthru
        _
      %p139 = scmp.le.s32.totalorder 1, %s11
      %p140 = scmp.lt.s32.totalorder %s11, 3
      %p141 = pnand %p139, %p140
      %p142 = pneg %p141
      // Predicated region
      $region44: #{invertible_1x1_conv.1} parent=5 // pred_check
        _
      $region45: #{invertible_1x1_conv.1} parent=5 // pred_check_branch
        %144 = sbr.rel (%p141) target = $region47
      $region46: #{invertible_1x1_conv.1} parent=5 // pred_region
        %s145 = ssub.s32 %s11, 1
        %s146 = sand.u32 %s45, 1
        %s147 = sand.u32 %s45, 1
        %s148 = smul.addr %s147, 32
        %s149 = scalar_lea.vmem [#allocation2], %s148
        // Predicated region
        $region48: #{invertible_1x1_conv.1} parent=46 // pred_check
          %p150 = pneg %p58
        $region49: #{invertible_1x1_conv.1} parent=46 // pred_check_branch
          %152 = sbr.rel (%p150) target = $region51
        $region50: #{invertible_1x1_conv.1} parent=46 // pred_region
          _
        $region51: #{invertible_1x1_conv.1} parent=46 // pred_fallthru
          _
        %p153 = pneg %p32
        %p154 = pneg %p29
        %s155 = sand.u32 %s45, 1
        %s156 = sand.u32 %s45, 1
        %s157 = smul.addr %s156, 32
        %s158 = scalar_lea.vmem [#allocation2], %s157
        %p159 = pneg %p58
        %p160 = pneg %p55
        %p161 = pneg %p84
        %p162 = pneg %p81
        %s163 = sand.u32 %s71, 1
        %s164 = scalar_lea.sflag [#allocation4], %s163
        %s165 = sand.u32 %s71, 1
        %s166 = smul.addr %s165, 32
        %s167 = scalar_lea.vmem [#allocation3], %s166
        %s168 = smul.u32 2, %s16
        %s169 = smul.u32 2, %s16
        %v170 = vld [vmem:[%s0] sm:$0xff]
        %v171 = vld [vmem:[%s0 + $0x8] sm:$0xff]
        %v172 = vld [vmem:[%s149] sm:$0xff]
        %v173 = vld [vmem:[%s149 + $0x8] sm:$0xff]
        %v174 = vld [vmem:[%s149 + $0x10] sm:$0xff]
        %v175 = vld [vmem:[%s149 + $0x18] sm:$0xff]
        %vm176 = vcmask 130048
        %v178 = vsel %vm176, %v170, 0
        %v181 = vsel %vm176, %v171, 0
        %183 = vmatprep.subr.mxu0 %v173
        %184 = vmatpush1.msra.mxu0 %v172
        %185 = vmatprep.subr.mxu0 %v175
        %186 = vmatpush1.msra.mxu0 %v174
        %187 = vmatprep.subr.mxu0 0.0
        %188 = vmatpush1.msra.mxu0 0.0
        %189 = vmatprep.subr.mxu0 0.0
        %190 = vmatpush1.msra.mxu0 0.0
        %191 = vmatprep.subr.mxu0 0.0
        %192 = vmatpush1.msra.mxu0 0.0
        %193 = vmatprep.subr.mxu0 0.0
        %194 = vmatpush1.msra.mxu0 0.0
        %195 = vmatprep.subr.mxu0 0.0
        %196 = vmatpush1.msra.mxu0 0.0
        %197 = vmatprep.subr.mxu0 0.0
        %198 = vmatpush1.msra.mxu0 0.0
        %199 = vmatprep.subr.mxu0 0.0
        %200 = vmatpush1.msra.mxu0 0.0
        %201 = vmatprep.subr.mxu0 0.0
        %202 = vmatpush1.msra.mxu0 0.0
        %203 = vmatprep.subr.mxu0 0.0
        %204 = vmatpush1.msra.mxu0 0.0
        %205 = vmatprep.subr.mxu0 0.0
        %206 = vmatpush1.msra.mxu0 0.0
        %207 = vmatprep.subr.mxu0 0.0
        %208 = vmatpush1.msra.mxu0 0.0
        %209 = vmatprep.subr.mxu0 0.0
        %210 = vmatpush1.msra.mxu0 0.0
        %211 = vmatprep.subr.mxu0 0.0
        %212 = vmatpush1.msra.mxu0 0.0
        %213 = vmatprep.subr.mxu0 0.0
        %214 = vmatpush1.msra.mxu0 0.0
        %215 = vmatprep.subr.mxu0 0.0
        %216 = vmatpush1.msra.mxu0 0.0
        %217 = vmatprep.subr.mxu0 0.0
        %218 = vmatpush1.msra.mxu0 0.0
        %219 = vmatprep.subr.mxu0 0.0
        %220 = vmatpush1.msra.mxu0 0.0
        %221 = vmatprep.subr.mxu0 0.0
        %222 = vmatpush1.msra.mxu0 0.0
        %223 = vmatprep.subr.mxu0 0.0
        %224 = vmatpush1.msra.mxu0 0.0
        %225 = vmatprep.subr.mxu0 0.0
        %226 = vmatpush1.msra.mxu0 0.0
        %227 = vmatprep.subr.mxu0 0.0
        %228 = vmatpush1.msra.mxu0 0.0
        %229 = vmatprep.subr.mxu0 0.0
        %230 = vmatpush1.msra.mxu0 0.0
        %231 = vmatprep.subr.mxu0 0.0
        %232 = vmatpush1.msra.mxu0 0.0
        %233 = vmatprep.subr.mxu0 0.0
        %234 = vmatpush1.msra.mxu0 0.0
        %235 = vmatprep.subr.mxu0 0.0
        %236 = vmatpush1.msra.mxu0 0.0
        %237 = vmatprep.subr.mxu0 0.0
        %238 = vmatpush1.msra.mxu0 0.0
        %239 = vmatprep.subr.mxu0 0.0
        %240 = vmatpush1.msra.mxu0 0.0
        %241 = vmatprep.subr.mxu0 0.0
        %242 = vmatpush1.msra.mxu0 0.0
        %243 = vmatprep.subr.mxu0 0.0
        %244 = vmatpush1.msra.mxu0 0.0
        %245 = vmatprep.subr.mxu0 0.0
        %246 = vmatpush1.msra.mxu0 0.0
        %247 = vmatprep.mubr.f32.mxu0 0.0
        %248 = vmatmul.mubr.f32.gmra.mrb[0].mxu0 %v178
        %v249 = vpop.f32.mrb[0].mxu0
        %v250 = vadd.f32 0.0, %v249
        %v251 = vpop.f32.mrb[0].mxu0
        %v252 = vadd.f32 0.0, %v251
        %253 = vmatprep.mubr.f32.mxu0 0.0
        %254 = vmatmul.mubr.f32.gmra.mrb[0].mxu0 %v181
        %v255 = vpop.f32.mrb[0].mxu0
        %v256 = vadd.f32 0.0, %v255
        %v257 = vpop.f32.mrb[0].mxu0
        %v258 = vadd.f32 0.0, %v257
        %259 = vdwg.mxu0
        %260 = vst [vmem:[%s167] sm:$0xff] %v250
        %261 = vst [vmem:[%s167 + $0x8] sm:$0xff] %v252
        %262 = vst [vmem:[%s167 + $0x10] sm:$0xff] %v256
        %263 = vst [vmem:[%s167 + $0x18] sm:$0xff] %v258
        %s264 = sand.u32 %s71, 1
        %s265 = scalar_lea.sflag [#allocation4], %s264
        %s266 = sand.u32 %s71, 1
        %s267 = smul.addr %s266, 32
        %s268 = scalar_lea.vmem [#allocation3], %s267
        // Predicated region
        $region52: #{invertible_1x1_conv.1} parent=46 // pred_check
          %p269 = pneg %p81
        $region53: #{invertible_1x1_conv.1} parent=46 // pred_check_branch
          %271 = sbr.rel (%p269) target = $region55
        $region54: #{invertible_1x1_conv.1} parent=46 // pred_region
          %s272 = smul.u32 2, %s16
          %s274 = ssub.s32 512, 512
          %275 = vsyncadd %s265, %s274
          %s276 = smul.addr %s272, 128
          %s277 = scalar_lea.hbm %s2, %s276
          %s278 = sshll.u32 %s268, 4
          %s279 = int_to_ptr.vmem [resolvable:$true] %s278
          %284 = dma.vmem_to_hbm [thread:$0]  %s279, 512, %s277, %s265, 256, 512, 16
        $region55: #{invertible_1x1_conv.1} parent=46 // pred_fallthru
          _
      $region47: #{invertible_1x1_conv.1} parent=5 // pred_fallthru
        _
      %p285 = scmp.le.s32.totalorder 2, %s11
      // Predicated region
      $region56: #{invertible_1x1_conv.1} parent=5 // pred_check
        %p286 = pneg %p285
      $region57: #{invertible_1x1_conv.1} parent=5 // pred_check_branch
        %288 = sbr.rel (%p286) target = $region59
      $region58: #{invertible_1x1_conv.1} parent=5 // pred_region
        %s289 = ssub.s32 %s11, 2
        // Predicated region
        $region60: #{invertible_1x1_conv.1} parent=58 // pred_check
          %p290 = pneg %p87
        $region61: #{invertible_1x1_conv.1} parent=58 // pred_check_branch
          %292 = sbr.rel (%p290) target = $region63
        $region62: #{invertible_1x1_conv.1} parent=58 // pred_region
          %s293 = sand.u32 %s72, 1
          %s294 = scalar_lea.sflag [#allocation4], %s293
          %s295 = sand.u32 %s72, 1
          %s296 = smul.addr %s295, 32
          %s297 = scalar_lea.vmem [#allocation3], %s296
          %298 = dma.done %s294, 512
        $region63: #{invertible_1x1_conv.1} parent=58 // pred_fallthru
          _
      $region59: #{invertible_1x1_conv.1} parent=5 // pred_fallthru
        _
    $region6: #{invertible_1x1_conv.1} parent=1 // loop_footer
      %s15 = sadd.s32 1, %s11
    $region7: #{invertible_1x1_conv.1} parent=1 // loop_footer_branch
      %10 = sbr.rel target = $region3
    $region8: #{invertible_1x1_conv.1} parent=1 // loop_exit
      _
    %299 = vsyncpa [#allocation4], 1
    %s300 = scalar_lea.sflag [#allocation4], 1
    %301 = vsyncpa %s300, 1

</llo_original>
